<compile_context>
chip_gen: v7x
topology: tpu7x:2x2x1
jax: 0.10.0
libtpu: 0.0.40
codegen_flags: <defaults>
</compile_context>

<pallas_src>
import functools
import math

import jax
import jax.numpy as jnp
from jax.experimental import pallas as pl
from jax.experimental.pallas import tpu as pltpu

LANE = 128  # lane-dense padding for the logits / output slab


def _radar_kernel(feat_ref, w_in_ref, b_in_ref, w_out_ref, b_out_ref,
                  t_pad_ref, m_pad_ref, seg_mean_ref, pad_row_ref, out_ref):
    x = feat_ref[...].astype(jnp.bfloat16)            # bf16 MXU operand

    # Fused first layer (classifier hidden + relation hidden share the input).
    z = jnp.dot(x, w_in_ref[...], preferred_element_type=jnp.float32) + b_in_ref[...]
    z = jnp.maximum(z, 0.0)                           # ReLU (both branches)
    # TODO(synk): nn.Dropout(p) is identity in eval mode; training RNG mask omitted.

    # Fused block-diagonal second layer (lane-aligned 256-wide slab):
    #   y[:, :LANE]  = logits padded to 128 lanes (zeros past C)
    #   y[:, LANE:]  = relation weights padded to 128 lanes (zeros past C*C)
    y = jnp.dot(z.astype(jnp.bfloat16), w_out_ref[...],
                preferred_element_type=jnp.float32) + b_out_ref[...]
    logits_pad = y[:, :LANE]                          # [bB, 128]  vreg-aligned
    rel = y[:, LANE:]                                 # [bB, 128]  vreg-aligned

    # Vectorized per-row softmax + bmm via indicator matmuls (MXU).
    # Stabilizing shift = per-ROW mean (shift-invariance of softmax): one
    # 128x128 matmul; guarantees denom >= ~1 on every real row, so no
    # underflow-to-zero denominator (unlike the old per-sample max).
    mean_tiled = jnp.dot(rel.astype(jnp.bfloat16), seg_mean_ref[...],
                         preferred_element_type=jnp.float32)
    e = jnp.exp(rel - mean_tiled)                     # one EUP launch, full vregs

    # logits_tiled[b, i*C + j] = logits[b, j]  (constant scatter matmul)
    logits_tiled = jnp.dot(logits_pad.astype(jnp.bfloat16), t_pad_ref[...],
                           preferred_element_type=jnp.float32)

    # Masked block reductions on the MXU:
    #   denom[b, i] = sum_j e[b, i*C + j]                 (+1 on padding lanes i >= C)
    #   num[b, i]   = sum_j e[b, i*C + j] * logits[b, j]  (0 on padding lanes)
    denom = jnp.dot(e.astype(jnp.bfloat16), m_pad_ref[...],
                    preferred_element_type=jnp.float32) + pad_row_ref[...]
    num = jnp.dot((e * logits_tiled).astype(jnp.bfloat16), m_pad_ref[...],
                  preferred_element_type=jnp.float32)

    inv = pl.reciprocal(denom, approx=True)           # EUP
    inv = inv * (2.0 - denom * inv)                   # one Newton step -> ~f32 accurate
    refined = num * inv
    out_ref[...] = (refined + logits_pad).astype(out_ref.dtype)   # lane-dense bf16 store


def prepare_params(params, num_classes):
    """One-time packing of PyTorch-layout weights into the fused kernel layout."""
    C = num_classes
    C2 = C * C
    rel_pad = ((C2 + LANE - 1) // LANE) * LANE        # 100 -> 128

    w1 = params["mlp_w1"].T.astype(jnp.float32)       # [F, H]
    rw1 = params["rel_w1"].T.astype(jnp.float32)      # [F, R]
    w2 = params["mlp_w2"].T.astype(jnp.float32)       # [H, C]
    rw2 = params["rel_w2"].T.astype(jnp.float32)      # [R, C2]
    H = w2.shape[0]
    R = rw2.shape[0]

    # Fused first layer (bf16 MXU operand).
    w_in = jnp.concatenate([w1, rw1], axis=1).astype(jnp.bfloat16)                # [F, H+R]
    b_in = jnp.concatenate([params["mlp_b1"], params["rel_b1"]])[None, :]
    b_in = b_in.astype(jnp.float32)                                               # [1, H+R]

    # Fused block-diagonal second layer, padded to lane multiples (256 wide).
    w_out = jnp.zeros((H + R, LANE + rel_pad), jnp.float32)
    w_out = w_out.at[:H, :C].set(w2)
    w_out = w_out.at[H:, LANE:LANE + C2].set(rw2)
    w_out = w_out.astype(jnp.bfloat16)
    b_out = jnp.zeros((1, LANE + rel_pad), jnp.float32)
    b_out = b_out.at[0, :C].set(params["mlp_b2"].astype(jnp.float32))
    b_out = b_out.at[0, LANE:LANE + C2].set(params["rel_b2"].astype(jnp.float32))

    # Constant indicator matrices (0/1 and 1/C are exact/near-exact in bf16).
    j = jnp.arange(LANE)[:, None]
    k = jnp.arange(rel_pad)[None, :]
    t_pad = ((k % C == j) & (k < C2)).astype(jnp.bfloat16)            # [LANE, rel_pad]

    kk = jnp.arange(rel_pad)[:, None]
    ii = jnp.arange(LANE)[None, :]
    # Rows k >= C2 are zero -> padded rel lanes never leak into real denom rows.
    m_pad = ((kk // C == ii) & (kk < C2)).astype(jnp.bfloat16)        # [rel_pad, LANE]

    ka = jnp.arange(rel_pad)[:, None]
    kb = jnp.arange(rel_pad)[None, :]
    seg_mean = (((ka // C) == (kb // C)) & (ka < C2) & (kb < C2)).astype(jnp.float32)
    seg_mean = (seg_mean / C).astype(jnp.bfloat16)                    # [rel_pad, rel_pad]

    pad_row = (jnp.arange(LANE) >= C).astype(jnp.float32)[None, :]    # keep denom != 0 on pads

    return {
        "w_in": w_in, "b_in": b_in,
        "w_out": w_out, "b_out": b_out,
        "t_pad": t_pad, "m_pad": m_pad, "seg_mean": seg_mean, "pad_row": pad_row,
    }


def _vmem_limit_bytes():
    """Generation-aware scoped-VMEM limit (conservative for unknown chips/v7x)."""
    try:
        kind = jax.devices()[0].device_kind.lower()
    except Exception:
        return 32 * 1024 * 1024
    if "v5" in kind or "v6" in kind:
        return 64 * 1024 * 1024        # 128 MiB physical -> plenty of headroom
    return 32 * 1024 * 1024            # v7x (64 MiB physical) / unknown: stay at default


def _pick_block_b(batch, feature_dim, hr, rel_pad, weight_bytes, vmem_limit):
    """Size the batch tile from the real per-step VMEM footprint."""
    per_row = (
        2 * feature_dim * 4            # double-buffered f32 feature stream
        + 2 * LANE * 2                 # double-buffered bf16 output slab
        + hr * 6                       # z (f32) + bf16 copy for the second matmul
        + 8 * (LANE + rel_pad) * 4     # y / rel / e / *_tiled / num / denom f32 temps
    )
    budget = int(0.6 * vmem_limit) - 2 * weight_bytes   # weights are double-buffered too
    budget = max(budget, 2 * 1024 * 1024)
    rows = max(8, budget // per_row)
    rows = min((rows // 8) * 8, 8192)
    if batch <= rows:
        if batch > 16:
            # Guarantee >=2 grid steps so ("parallel",) shards across both v7x TCs.
            half = ((-(-batch // 2) + 7) // 8) * 8
            return max(8, min(rows, half))
        return batch                   # tiny batch: single full-extent block
    return rows


@functools.partial(jax.jit, static_argnames=("num_classes",))
def radar_classifier_forward(features, packed, num_classes):
    """features: [B, feature_dim] float32; packed: output of prepare_params()."""
    B, F = features.shape
    w_in, b_in = packed["w_in"], packed["b_in"]
    w_out, b_out = packed["w_out"], packed["b_out"]
    t_pad, m_pad = packed["t_pad"], packed["m_pad"]
    seg_mean, pad_row = packed["seg_mean"], packed["pad_row"]

    HR = w_in.shape[1]
    rel_pad = t_pad.shape[1]

    weight_bytes = sum(int(a.size * a.dtype.itemsize)
                       for a in (w_in, b_in, w_out, b_out, t_pad, m_pad, seg_mean, pad_row))
    vmem_limit = _vmem_limit_bytes()
    block_b = _pick_block_b(B, F, HR, rel_pad, weight_bytes, vmem_limit)
    grid = (pl.cdiv(B, block_b),)

    def resident(arr):
        return pl.BlockSpec(arr.shape, lambda i: (0, 0))

    in_specs = [
        pl.BlockSpec((block_b, F), lambda i: (i, 0)),   # streamed features
        resident(w_in), resident(b_in),
        resident(w_out), resident(b_out),
        resident(t_pad), resident(m_pad), resident(seg_mean), resident(pad_row),
    ]
    out_specs = pl.BlockSpec((block_b, LANE), lambda i: (i, 0))

    cost = pl.CostEstimate(
        flops=int(2 * B * (F * HR + HR * (LANE + rel_pad)
                           + rel_pad * rel_pad + LANE * rel_pad + 2 * rel_pad * LANE)),
        transcendentals=int(B * (rel_pad + LANE)),
        bytes_accessed=int(4 * B * F + 2 * B * LANE + weight_bytes),
    )

    out_padded = pl.pallas_call(
        _radar_kernel,
        out_shape=jax.ShapeDtypeStruct((B, LANE), jnp.bfloat16),   # bf16 writeback slab
        grid=grid,
        in_specs=in_specs,
        out_specs=out_specs,
        compiler_params=pltpu.CompilerParams(
            dimension_semantics=("parallel",),          # megacore sharding on v7x
            vmem_limit_bytes=vmem_limit,
        ),
        cost_estimate=cost,
    )(features, w_in, b_in, w_out, b_out, t_pad, m_pad, seg_mean, pad_row)

    # Lane-dense [B, 128] bf16 store inside the kernel; strip padding + upcast here.
    return out_padded[:, :num_classes].astype(jnp.float32)


def _init_params(key, feature_dim, num_classes, hidden_dim, relation_dim):
    """Deterministic synthetic init mirroring the PyTorch module's shapes."""
    ks = jax.random.split(key, 8)

    def kaiming_uniform(k, out_f, in_f):
        bound = 1.0 / math.sqrt(in_f)
        return jax.random.uniform(k, (out_f, in_f), jnp.float32, -bound, bound)

    def bias_uniform(k, out_f, in_f):
        bound = 1.0 / math.sqrt(in_f)
        return jax.random.uniform(k, (out_f,), jnp.float32, -bound, bound)

    def xavier_uniform(k, out_f, in_f):
        bound = math.sqrt(6.0 / (in_f + out_f))
        return jax.random.uniform(k, (out_f, in_f), jnp.float32, -bound, bound)

    C2 = num_classes * num_classes
    return {
        # MLPClassifier
        "mlp_w1": kaiming_uniform(ks[0], hidden_dim, feature_dim),
        "mlp_b1": bias_uniform(ks[1], hidden_dim, feature_dim),
        "mlp_w2": kaiming_uniform(ks[2], num_classes, hidden_dim),
        "mlp_b2": bias_uniform(ks[3], num_classes, hidden_dim),
        # LabelRelationEncoder
        "rel_w1": kaiming_uniform(ks[4], relation_dim, feature_dim),
        "rel_b1": bias_uniform(ks[5], relation_dim, feature_dim),
        "rel_w2": xavier_uniform(ks[6], C2, relation_dim),   # xavier_uniform_ per module init
        "rel_b2": jnp.zeros((C2,), jnp.float32),             # bias zeroed per module init
    }


def _reference_forward(features, params, num_classes):
    """Pure-JAX reference of the PyTorch forward (eval mode)."""
    h = jnp.maximum(features @ params["mlp_w1"].T + params["mlp_b1"], 0.0)
    logits = h @ params["mlp_w2"].T + params["mlp_b2"]
    r = jnp.maximum(features @ params["rel_w1"].T + params["rel_b1"], 0.0)
    rel = r @ params["rel_w2"].T + params["rel_b2"]
    P = jax.nn.softmax(rel.reshape(-1, num_classes, num_classes), axis=-1)
    refined = jnp.einsum("bij,bj->bi", P, logits)
    return refined + logits


if __name__ == "__main__":
    B = 2
    feature_dim = 64
    num_classes = 10
    hidden_dim = 32
    relation_dim = 32

    key = jax.random.PRNGKey(0)
    k_feat, k_params = jax.random.split(key)
    features = jax.random.normal(k_feat, (B, feature_dim), jnp.float32)
    params = _init_params(k_params, feature_dim, num_classes, hidden_dim, relation_dim)

    packed = prepare_params(params, num_classes)      # one-time weight packing (hoisted)

    out = radar_classifier_forward(features, packed, num_classes)
    out = jax.block_until_ready(out)
    assert out.shape == (B, num_classes)
    assert bool(jnp.all(jnp.isfinite(out)))

    # Reference with the same bf16-rounded matmul operands isolates kernel
    # structure from the (intentional) bf16 MXU quantization.
    def _bf16(a):
        return a.astype(jnp.bfloat16).astype(jnp.float32)
    params_bf16 = {k: (_bf16(v) if v.ndim == 2 else v) for k, v in params.items()}
    ref_bf16 = _reference_forward(_bf16(features), params_bf16, num_classes)
    assert jnp.allclose(out, ref_bf16, atol=2e-2, rtol=2e-2), (out, ref_bf16)

    # Looser check against the exact f32 reference (bf16 operand rounding only).
    ref = _reference_forward(features, params, num_classes)
    assert jnp.allclose(out, ref, atol=6e-2, rtol=6e-2), (out, ref)

    print("KERNEL_OK")
</pallas_src>

<mosaic_0001>
module attributes {stable_mosaic.version = 11 : i64} {
  func.func @_radar_kernel(%arg0: i32, %arg1: memref<2x64xf32, #tpu.memory_space<vmem>>, %arg2: memref<64x64xbf16, #tpu.memory_space<vmem>>, %arg3: memref<1x64xf32, #tpu.memory_space<vmem>>, %arg4: memref<64x256xbf16, #tpu.memory_space<vmem>>, %arg5: memref<1x256xf32, #tpu.memory_space<vmem>>, %arg6: memref<128x128xbf16, #tpu.memory_space<vmem>>, %arg7: memref<128x128xbf16, #tpu.memory_space<vmem>>, %arg8: memref<128x128xbf16, #tpu.memory_space<vmem>>, %arg9: memref<1x128xf32, #tpu.memory_space<vmem>>, %arg10: memref<2x128xbf16, #tpu.memory_space<vmem>>) attributes {dimension_semantics = [#tpu.dimension_semantics<parallel>], iteration_bounds = array<i64: 1>, scalar_prefetch = 0 : i64, scratch_operands = 0 : i64, tpu.core_type = #tpu.core_type<tc>, window_params = [{transform_indices = @transform_0, window_bounds = array<i64: 2, 64>}, {pipeline_mode = #tpu.pipeline_mode<synchronous>, transform_indices = @transform_1, window_bounds = array<i64: 64, 64>}, {pipeline_mode = #tpu.pipeline_mode<synchronous>, transform_indices = @transform_2, window_bounds = array<i64: 1, 64>}, {pipeline_mode = #tpu.pipeline_mode<synchronous>, transform_indices = @transform_3, window_bounds = array<i64: 64, 256>}, {pipeline_mode = #tpu.pipeline_mode<synchronous>, transform_indices = @transform_4, window_bounds = array<i64: 1, 256>}, {pipeline_mode = #tpu.pipeline_mode<synchronous>, transform_indices = @transform_5, window_bounds = array<i64: 128, 128>}, {pipeline_mode = #tpu.pipeline_mode<synchronous>, transform_indices = @transform_6, window_bounds = array<i64: 128, 128>}, {pipeline_mode = #tpu.pipeline_mode<synchronous>, transform_indices = @transform_7, window_bounds = array<i64: 128, 128>}, {pipeline_mode = #tpu.pipeline_mode<synchronous>, transform_indices = @transform_8, window_bounds = array<i64: 1, 128>}, {transform_indices = @transform_9, window_bounds = array<i64: 2, 128>}]} {
    %c0 = arith.constant 0 : index
    %c0_0 = arith.constant 0 : index
    %0 = vector.load %arg1[%c0, %c0_0] : memref<2x64xf32, #tpu.memory_space<vmem>>, vector<2x64xf32>
    %1 = arith.truncf %0 : vector<2x64xf32> to vector<2x64xbf16>
    %c0_1 = arith.constant 0 : index
    %c0_2 = arith.constant 0 : index
    %2 = vector.load %arg2[%c0_1, %c0_2] : memref<64x64xbf16, #tpu.memory_space<vmem>>, vector<64x64xbf16>
    %cst = arith.constant dense<0.000000e+00> : vector<2x64xf32>
    %3 = tpu.matmul %1, %2, %cst {dimension_numbers = #tpu.dot_dimension_numbers<[1], [0], [0], [1], [0, 0, 1, 1], [], []>} : vector<2x64xbf16>, vector<64x64xbf16>, vector<2x64xf32> -> vector<2x64xf32>
    %c0_3 = arith.constant 0 : index
    %c0_4 = arith.constant 0 : index
    %4 = vector.load %arg3[%c0_3, %c0_4] : memref<1x64xf32, #tpu.memory_space<vmem>>, vector<1x64xf32>
    %5 = vector.broadcast %4 : vector<1x64xf32> to vector<2x64xf32>
    %6 = arith.addf %3, %5 : vector<2x64xf32>
    %cst_5 = arith.constant 0.000000e+00 : f32
    %7 = vector.broadcast %cst_5 : f32 to vector<2x64xf32>
    %8 = arith.maximumf %6, %7 : vector<2x64xf32>
    %9 = arith.truncf %8 : vector<2x64xf32> to vector<2x64xbf16>
    %c0_6 = arith.constant 0 : index
    %c0_7 = arith.constant 0 : index
    %10 = vector.load %arg4[%c0_6, %c0_7] : memref<64x256xbf16, #tpu.memory_space<vmem>>, vector<64x256xbf16>
    %cst_8 = arith.constant dense<0.000000e+00> : vector<2x256xf32>
    %11 = tpu.matmul %9, %10, %cst_8 {dimension_numbers = #tpu.dot_dimension_numbers<[1], [0], [0], [1], [0, 0, 1, 1], [], []>} : vector<2x64xbf16>, vector<64x256xbf16>, vector<2x256xf32> -> vector<2x256xf32>
    %c0_9 = arith.constant 0 : index
    %c0_10 = arith.constant 0 : index
    %12 = vector.load %arg5[%c0_9, %c0_10] : memref<1x256xf32, #tpu.memory_space<vmem>>, vector<1x256xf32>
    %13 = vector.broadcast %12 : vector<1x256xf32> to vector<2x256xf32>
    %14 = arith.addf %11, %13 : vector<2x256xf32>
    %15 = vector.extract_strided_slice %14 {offsets = [0, 0], sizes = [2, 128], strides = [1, 1]} : vector<2x256xf32> to vector<2x128xf32>
    %16 = vector.extract_strided_slice %14 {offsets = [0, 128], sizes = [2, 128], strides = [1, 1]} : vector<2x256xf32> to vector<2x128xf32>
    %17 = arith.truncf %16 : vector<2x128xf32> to vector<2x128xbf16>
    %c0_11 = arith.constant 0 : index
    %c0_12 = arith.constant 0 : index
    %18 = vector.load %arg8[%c0_11, %c0_12] : memref<128x128xbf16, #tpu.memory_space<vmem>>, vector<128x128xbf16>
    %cst_13 = arith.constant dense<0.000000e+00> : vector<2x128xf32>
    %19 = tpu.matmul %17, %18, %cst_13 {dimension_numbers = #tpu.dot_dimension_numbers<[1], [0], [0], [1], [0, 0, 1, 1], [], []>} : vector<2x128xbf16>, vector<128x128xbf16>, vector<2x128xf32> -> vector<2x128xf32>
    %20 = arith.subf %16, %19 : vector<2x128xf32>
    %21 = math.exp %20 : vector<2x128xf32>
    %22 = arith.truncf %15 : vector<2x128xf32> to vector<2x128xbf16>
    %c0_14 = arith.constant 0 : index
    %c0_15 = arith.constant 0 : index
    %23 = vector.load %arg6[%c0_14, %c0_15] : memref<128x128xbf16, #tpu.memory_space<vmem>>, vector<128x128xbf16>
    %cst_16 = arith.constant dense<0.000000e+00> : vector<2x128xf32>
    %24 = tpu.matmul %22, %23, %cst_16 {dimension_numbers = #tpu.dot_dimension_numbers<[1], [0], [0], [1], [0, 0, 1, 1], [], []>} : vector<2x128xbf16>, vector<128x128xbf16>, vector<2x128xf32> -> vector<2x128xf32>
    %25 = arith.truncf %21 : vector<2x128xf32> to vector<2x128xbf16>
    %c0_17 = arith.constant 0 : index
    %c0_18 = arith.constant 0 : index
    %26 = vector.load %arg7[%c0_17, %c0_18] : memref<128x128xbf16, #tpu.memory_space<vmem>>, vector<128x128xbf16>
    %cst_19 = arith.constant dense<0.000000e+00> : vector<2x128xf32>
    %27 = tpu.matmul %25, %26, %cst_19 {dimension_numbers = #tpu.dot_dimension_numbers<[1], [0], [0], [1], [0, 0, 1, 1], [], []>} : vector<2x128xbf16>, vector<128x128xbf16>, vector<2x128xf32> -> vector<2x128xf32>
    %c0_20 = arith.constant 0 : index
    %c0_21 = arith.constant 0 : index
    %28 = vector.load %arg9[%c0_20, %c0_21] : memref<1x128xf32, #tpu.memory_space<vmem>>, vector<1x128xf32>
    %29 = vector.broadcast %28 : vector<1x128xf32> to vector<2x128xf32>
    %30 = arith.addf %27, %29 : vector<2x128xf32>
    %31 = arith.mulf %21, %24 : vector<2x128xf32>
    %32 = arith.truncf %31 : vector<2x128xf32> to vector<2x128xbf16>
    %c0_22 = arith.constant 0 : index
    %c0_23 = arith.constant 0 : index
    %33 = vector.load %arg7[%c0_22, %c0_23] : memref<128x128xbf16, #tpu.memory_space<vmem>>, vector<128x128xbf16>
    %cst_24 = arith.constant dense<0.000000e+00> : vector<2x128xf32>
    %34 = tpu.matmul %32, %33, %cst_24 {dimension_numbers = #tpu.dot_dimension_numbers<[1], [0], [0], [1], [0, 0, 1, 1], [], []>} : vector<2x128xbf16>, vector<128x128xbf16>, vector<2x128xf32> -> vector<2x128xf32>
    %35 = tpu.reciprocal %30 {approx = true} : vector<2x128xf32> -> vector<2x128xf32>
    %36 = arith.mulf %30, %35 : vector<2x128xf32>
    %cst_25 = arith.constant 2.000000e+00 : f32
    %37 = vector.broadcast %cst_25 : f32 to vector<2x128xf32>
    %38 = arith.subf %37, %36 : vector<2x128xf32>
    %39 = arith.mulf %35, %38 : vector<2x128xf32>
    %40 = arith.mulf %34, %39 : vector<2x128xf32>
    %41 = arith.addf %40, %15 : vector<2x128xf32>
    %42 = arith.truncf %41 : vector<2x128xf32> to vector<2x128xbf16>
    %c0_26 = arith.constant 0 : index
    %c0_27 = arith.constant 0 : index
    %43 = vector.load %arg10[%c0_26, %c0_27] : memref<2x128xbf16, #tpu.memory_space<vmem>>, vector<2x128xbf16>
    tpu.vector_store %arg10[%c0_26, %c0_27], %42 {strides = array<i32>} : memref<2x128xbf16, #tpu.memory_space<vmem>>, vector<2x128xbf16>,
    return
  }
  func.func @transform_0(%arg0: i32) -> (i32, i32) {
    %c0_i32 = arith.constant 0 : i32
    %c0_i32_0 = arith.constant 0 : i32
    return %arg0, %c0_i32 : i32, i32
  }
  func.func @transform_1(%arg0: i32) -> (i32, i32) {
    %c0_i32 = arith.constant 0 : i32
    %c0_i32_0 = arith.constant 0 : i32
    %c0_i32_1 = arith.constant 0 : i32
    return %c0_i32, %c0_i32_0 : i32, i32
  }
  func.func @transform_2(%arg0: i32) -> (i32, i32) {
    %c0_i32 = arith.constant 0 : i32
    %c0_i32_0 = arith.constant 0 : i32
    %c0_i32_1 = arith.constant 0 : i32
    return %c0_i32, %c0_i32_0 : i32, i32
  }
  func.func @transform_3(%arg0: i32) -> (i32, i32) {
    %c0_i32 = arith.constant 0 : i32
    %c0_i32_0 = arith.constant 0 : i32
    %c0_i32_1 = arith.constant 0 : i32
    return %c0_i32, %c0_i32_0 : i32, i32
  }
  func.func @transform_4(%arg0: i32) -> (i32, i32) {
    %c0_i32 = arith.constant 0 : i32
    %c0_i32_0 = arith.constant 0 : i32
    %c0_i32_1 = arith.constant 0 : i32
    return %c0_i32, %c0_i32_0 : i32, i32
  }
  func.func @transform_5(%arg0: i32) -> (i32, i32) {
    %c0_i32 = arith.constant 0 : i32
    %c0_i32_0 = arith.constant 0 : i32
    %c0_i32_1 = arith.constant 0 : i32
    return %c0_i32, %c0_i32_0 : i32, i32
  }
  func.func @transform_6(%arg0: i32) -> (i32, i32) {
    %c0_i32 = arith.constant 0 : i32
    %c0_i32_0 = arith.constant 0 : i32
    %c0_i32_1 = arith.constant 0 : i32
    return %c0_i32, %c0_i32_0 : i32, i32
  }
  func.func @transform_7(%arg0: i32) -> (i32, i32) {
    %c0_i32 = arith.constant 0 : i32
    %c0_i32_0 = arith.constant 0 : i32
    %c0_i32_1 = arith.constant 0 : i32
    return %c0_i32, %c0_i32_0 : i32, i32
  }
  func.func @transform_8(%arg0: i32) -> (i32, i32) {
    %c0_i32 = arith.constant 0 : i32
    %c0_i32_0 = arith.constant 0 : i32
    %c0_i32_1 = arith.constant 0 : i32
    return %c0_i32, %c0_i32_0 : i32, i32
  }
  func.func @transform_9(%arg0: i32) -> (i32, i32) {
    %c0_i32 = arith.constant 0 : i32
    %c0_i32_0 = arith.constant 0 : i32
    return %arg0, %c0_i32 : i32, i32
  }
}

</mosaic_0001>

<llo_original>
// kernel: radar_classifier_forward.1
$region0: #{radar_classifier_forward.1}
  #allocation0 [shape = 'u32[]', space=smem, size = 0x4, offset = 0x4, fixed_abs, tag = 'smem constant byte address 0x4 - core index']
  #allocation1 [shape = 'u32[144,128]{1,0:T(1,128)}', space=vmem, size = 0x12000, scoped, tag = 'internal scratch']
  %s0 = inlined_call_operand.hbm [shape: f32[2,64], index: 0, kind: input, shape index: {}]
  %s1 = inlined_call_operand.hbm [shape: bf16[64,64], index: 1, kind: input, shape index: {}]
  %s2 = inlined_call_operand.vmem [shape: f32[1,64], index: 2, kind: input, shape index: {}]
  %s3 = inlined_call_operand.hbm [shape: bf16[64,256], index: 3, kind: input, shape index: {}]
  %s4 = inlined_call_operand.vmem [shape: f32[1,256], index: 4, kind: input, shape index: {}]
  %s5 = inlined_call_operand.hbm [shape: bf16[128,128], index: 5, kind: input, shape index: {}]
  %s6 = inlined_call_operand.hbm [shape: bf16[128,128], index: 6, kind: input, shape index: {}]
  %s7 = inlined_call_operand.hbm [shape: bf16[128,128], index: 7, kind: input, shape index: {}]
  %s8 = inlined_call_operand.vmem [shape: f32[1,128], index: 8, kind: input, shape index: {}]
  %s9 = inlined_call_operand.vmem [shape: bf16[2,128], index: 9, kind: output, shape index: {}]
  %s10 = sld [smem:[#allocation0]]
  $region70: #{radar_classifier_forward.1} parent=0
    _
  %s12 = ssub.s32 1, %s10
  %s13 = scalar_select 0, %s12, %s10
  $region1: #{radar_classifier_forward.1} parent=0
    #allocation2 [shape = 'u8[1024]{0}', space=vmem, size = 0x400, scoped, tag = 'input window, operand 0, single buffered']
    #allocation3 [shape = 's32[1]{0}', space=sflag, size = 0x4, scoped, tag = 'scoped memory for radar_classifier_forward.1']
    #allocation4 [shape = 'u8[16384]{0}', space=vmem, size = 0x4000, scoped, tag = 'input window, operand 1, single buffered']
    #allocation5 [shape = 's32[1]{0}', space=sflag, size = 0x4, scoped, tag = 'scoped memory for radar_classifier_forward.1']
    #allocation6 [shape = 'u8[32768]{0}', space=vmem, size = 0x8000, scoped, tag = 'input window, operand 3, single buffered']
    #allocation7 [shape = 'u8[32768]{0}', space=vmem, size = 0x8000, scoped, tag = 'input window, operand 5, single buffered']
    #allocation8 [shape = 's32[1]{0}', space=sflag, size = 0x4, scoped, tag = 'scoped memory for radar_classifier_forward.1']
    #allocation9 [shape = 'u8[32768]{0}', space=vmem, size = 0x8000, scoped, tag = 'input window, operand 6, single buffered']
    #allocation10 [shape = 'u8[32768]{0}', space=vmem, size = 0x8000, scoped, tag = 'input window, operand 7, single buffered']
    #allocation11 [shape = 's32[1]{0}', space=sflag, size = 0x4, scoped, tag = 'scoped memory for radar_classifier_forward.1']
    %14 = vsyncpa [#allocation3], 0
    %15 = vsyncpa [#allocation5], 0
    %16 = vsyncpa [#allocation8], 0
    %17 = vsyncpa [#allocation11], 0
    // Predicated region
    $region2: #{radar_classifier_forward.1} parent=1 // pred_check
      _
    $region3: #{radar_classifier_forward.1} parent=1 // pred_check_branch
      %19 = sbr.rel (0) target = $region5
    $region4: #{radar_classifier_forward.1} parent=1 // pred_region
      %s21 = ssub.s32 32, 32
      %22 = vsyncadd [#allocation3], %s21
      %s24 = sshll.u32 [#allocation2], 4
      %s25 = int_to_ptr.vmem [resolvable:$true] %s24
      %27 = dma.hbm_to_vmem [thread:$0]  %s0, 32, %s25, [#allocation3]
    $region5: #{radar_classifier_forward.1} parent=1 // pred_fallthru
      _
    // Predicated region
    $region6: #{radar_classifier_forward.1} parent=1 // pred_check
      _
    $region7: #{radar_classifier_forward.1} parent=1 // pred_check_branch
      %29 = sbr.rel (0) target = $region9
    $region8: #{radar_classifier_forward.1} parent=1 // pred_region
      %s31 = ssub.s32 512, 512
      %32 = vsyncadd [#allocation5], %s31
      %s33 = sshll.u32 [#allocation4], 4
      %s34 = int_to_ptr.vmem [resolvable:$true] %s33
      %39 = dma.hbm_to_vmem [thread:$0]  %s1, 512, %s34, [#allocation5], 64, 64, 4
    $region9: #{radar_classifier_forward.1} parent=1 // pred_fallthru
      _
    // Predicated region
    $region10: #{radar_classifier_forward.1} parent=1 // pred_check
      _
    $region11: #{radar_classifier_forward.1} parent=1 // pred_check_branch
      %41 = sbr.rel (0) target = $region13
    $region12: #{radar_classifier_forward.1} parent=1 // pred_region
      _
    $region13: #{radar_classifier_forward.1} parent=1 // pred_fallthru
      _
    // Predicated region
    $region14: #{radar_classifier_forward.1} parent=1 // pred_check
      _
    $region15: #{radar_classifier_forward.1} parent=1 // pred_check_branch
      %43 = sbr.rel (0) target = $region17
    $region16: #{radar_classifier_forward.1} parent=1 // pred_region
      %s45 = ssub.s32 1024, 1024
      %46 = vsyncadd [#allocation5], %s45
      %s47 = sshll.u32 [#allocation6], 4
      %s48 = int_to_ptr.vmem [resolvable:$true] %s47
      %53 = dma.hbm_to_vmem [thread:$0]  %s3, 1024, %s48, [#allocation5], 128, 128, 8
    $region17: #{radar_classifier_forward.1} parent=1 // pred_fallthru
      _
    // Predicated region
    $region18: #{radar_classifier_forward.1} parent=1 // pred_check
      _
    $region19: #{radar_classifier_forward.1} parent=1 // pred_check_branch
      %55 = sbr.rel (0) target = $region21
    $region20: #{radar_classifier_forward.1} parent=1 // pred_region
      _
    $region21: #{radar_classifier_forward.1} parent=1 // pred_fallthru
      _
    // Predicated region
    $region22: #{radar_classifier_forward.1} parent=1 // pred_check
      _
    $region23: #{radar_classifier_forward.1} parent=1 // pred_check_branch
      %57 = sbr.rel (0) target = $region25
    $region24: #{radar_classifier_forward.1} parent=1 // pred_region
      %s59 = ssub.s32 1024, 1024
      %60 = vsyncadd [#allocation8], %s59
      %s61 = sshll.u32 [#allocation7], 4
      %s62 = int_to_ptr.vmem [resolvable:$true] %s61
      %67 = dma.hbm_to_vmem [thread:$0]  %s5, 1024, %s62, [#allocation8], 64, 64, 4
    $region25: #{radar_classifier_forward.1} parent=1 // pred_fallthru
      _
    // Predicated region
    $region26: #{radar_classifier_forward.1} parent=1 // pred_check
      _
    $region27: #{radar_classifier_forward.1} parent=1 // pred_check_branch
      %69 = sbr.rel (0) target = $region29
    $region28: #{radar_classifier_forward.1} parent=1 // pred_region
      %s71 = ssub.s32 1024, 1024
      %72 = vsyncadd [#allocation8], %s71
      %s73 = sshll.u32 [#allocation9], 4
      %s74 = int_to_ptr.vmem [resolvable:$true] %s73
      %79 = dma.hbm_to_vmem [thread:$0]  %s6, 1024, %s74, [#allocation8], 64, 64, 4
    $region29: #{radar_classifier_forward.1} parent=1 // pred_fallthru
      _
    // Predicated region
    $region30: #{radar_classifier_forward.1} parent=1 // pred_check
      _
    $region31: #{radar_classifier_forward.1} parent=1 // pred_check_branch
      %81 = sbr.rel (0) target = $region33
    $region32: #{radar_classifier_forward.1} parent=1 // pred_region
      %s83 = ssub.s32 1024, 1024
      %84 = vsyncadd [#allocation11], %s83
      %s85 = sshll.u32 [#allocation10], 4
      %s86 = int_to_ptr.vmem [resolvable:$true] %s85
      %91 = dma.hbm_to_vmem [thread:$0]  %s7, 1024, %s86, [#allocation11], 64, 64, 4
    $region33: #{radar_classifier_forward.1} parent=1 // pred_fallthru
      _
    // Predicated region
    $region34: #{radar_classifier_forward.1} parent=1 // pred_check
      _
    $region35: #{radar_classifier_forward.1} parent=1 // pred_check_branch
      %93 = sbr.rel (0) target = $region37
    $region36: #{radar_classifier_forward.1} parent=1 // pred_region
      _
    $region37: #{radar_classifier_forward.1} parent=1 // pred_fallthru
      _
    // Predicated region
    $region38: #{radar_classifier_forward.1} parent=1 // pred_check
      _
    $region39: #{radar_classifier_forward.1} parent=1 // pred_check_branch
      %95 = sbr.rel (0) target = $region41
    $region40: #{radar_classifier_forward.1} parent=1 // pred_region
      %96 = dma.done [#allocation3], 32
    $region41: #{radar_classifier_forward.1} parent=1 // pred_fallthru
      _
    // Predicated region
    $region42: #{radar_classifier_forward.1} parent=1 // pred_check
      _
    $region43: #{radar_classifier_forward.1} parent=1 // pred_check_branch
      %98 = sbr.rel (0) target = $region45
    $region44: #{radar_classifier_forward.1} parent=1 // pred_region
      %99 = dma.done [#allocation5], 512
    $region45: #{radar_classifier_forward.1} parent=1 // pred_fallthru
      _
    // Predicated region
    $region46: #{radar_classifier_forward.1} parent=1 // pred_check
      _
    $region47: #{radar_classifier_forward.1} parent=1 // pred_check_branch
      %101 = sbr.rel (0) target = $region49
    $region48: #{radar_classifier_forward.1} parent=1 // pred_region
      %102 = dma.done [#allocation5], 1024
    $region49: #{radar_classifier_forward.1} parent=1 // pred_fallthru
      _
    // Predicated region
    $region50: #{radar_classifier_forward.1} parent=1 // pred_check
      _
    $region51: #{radar_classifier_forward.1} parent=1 // pred_check_branch
      %104 = sbr.rel (0) target = $region53
    $region52: #{radar_classifier_forward.1} parent=1 // pred_region
      %105 = dma.done [#allocation8], 1024
    $region53: #{radar_classifier_forward.1} parent=1 // pred_fallthru
      _
    // Predicated region
    $region54: #{radar_classifier_forward.1} parent=1 // pred_check
      _
    $region55: #{radar_classifier_forward.1} parent=1 // pred_check_branch
      %107 = sbr.rel (0) target = $region57
    $region56: #{radar_classifier_forward.1} parent=1 // pred_region
      %108 = dma.done [#allocation8], 1024
    $region57: #{radar_classifier_forward.1} parent=1 // pred_fallthru
      _
    // Predicated region
    $region58: #{radar_classifier_forward.1} parent=1 // pred_check
      _
    $region59: #{radar_classifier_forward.1} parent=1 // pred_check_branch
      %110 = sbr.rel (0) target = $region61
    $region60: #{radar_classifier_forward.1} parent=1 // pred_region
      %111 = dma.done [#allocation11], 1024
    $region61: #{radar_classifier_forward.1} parent=1 // pred_fallthru
      _
    %v113 = vld [vmem:[#allocation2] sm:$0x3]
    %v114 = vpack.c.bf16 %v113, %v113
    %v115 = vld [vmem:[#allocation4] sm:$0xf]
    %v116 = vld [vmem:[#allocation4 + $0x4] sm:$0xf]
    %v117 = vld [vmem:[#allocation4 + $0x8] sm:$0xf]
    %v118 = vld [vmem:[#allocation4 + $0xc] sm:$0xf]
    %v119 = vld [vmem:[#allocation4 + $0x10] sm:$0xf]
    %v120 = vld [vmem:[#allocation4 + $0x14] sm:$0xf]
    %v121 = vld [vmem:[#allocation4 + $0x18] sm:$0xf]
    %v122 = vld [vmem:[#allocation4 + $0x1c] sm:$0xf]
    %v123 = vld [vmem:[%s2] sm:$0x1]
    %v125 = vlaneseq
    %v126 = vshrl.u32 %v125, 7
    %v127 = vsub.s32 0, %v126
    %v128 = vrot.slane %v123, %v127
    %v138 = vunpack.c.l.b16 %v115
    %v139 = vunpack.c.l.b16 %v116
    %v140 = vunpack.c.l.b16 %v117
    %v141 = vunpack.c.l.b16 %v118
    %v142 = vunpack.c.l.b16 %v119
    %v143 = vunpack.c.l.b16 %v120
    %v144 = vunpack.c.l.b16 %v121
    %v145 = vunpack.c.l.b16 %v122
    %v146 = vpack.c.b16 %v139, %v138
    %v147 = vpack.c.b16 %v141, %v140
    %v148 = vpack.c.b16 %v143, %v142
    %v149 = vpack.c.b16 %v145, %v144
    %vm154 = vcmask 523264
    %v156 = vsel %vm154, %v114, 0
    %158 = vmatprep.subr.bf16.mxu0 0
    %159 = vmatpush1.bf16.msra.mxu0 %v146
    %160 = vmatprep.subr.bf16.mxu0 0
    %161 = vmatpush1.bf16.msra.mxu0 %v147
    %162 = vmatprep.subr.bf16.mxu0 0
    %163 = vmatpush1.bf16.msra.mxu0 %v148
    %164 = vmatprep.subr.bf16.mxu0 0
    %165 = vmatpush1.bf16.msra.mxu0 %v149
    %166 = vmatprep.subr.bf16.mxu0 0
    %167 = vmatpush1.bf16.msra.mxu0 0
    %168 = vmatprep.subr.bf16.mxu0 0
    %169 = vmatpush1.bf16.msra.mxu0 0
    %170 = vmatprep.subr.bf16.mxu0 0
    %171 = vmatpush1.bf16.msra.mxu0 0
    %172 = vmatprep.subr.bf16.mxu0 0
    %173 = vmatpush1.bf16.msra.mxu0 0
    %174 = vmatprep.subr.bf16.mxu0 0
    %175 = vmatpush1.bf16.msra.mxu0 0
    %176 = vmatprep.subr.bf16.mxu0 0
    %177 = vmatpush1.bf16.msra.mxu0 0
    %178 = vmatprep.subr.bf16.mxu0 0
    %179 = vmatpush1.bf16.msra.mxu0 0
    %180 = vmatprep.subr.bf16.mxu0 0
    %181 = vmatpush1.bf16.msra.mxu0 0
    %182 = vmatprep.subr.bf16.mxu0 0
    %183 = vmatpush1.bf16.msra.mxu0 0
    %184 = vmatprep.subr.bf16.mxu0 0
    %185 = vmatpush1.bf16.msra.mxu0 0
    %186 = vmatprep.subr.bf16.mxu0 0
    %187 = vmatpush1.bf16.msra.mxu0 0
    %188 = vmatprep.subr.bf16.mxu0 0
    %189 = vmatpush1.bf16.msra.mxu0 0
    %190 = vmatprep.mubr.bf16.mxu0 0
    %191 = vmatmul.mubr.bf16.gmra.mrb[0].mxu0 %v156
    %v192 = vpop.f32.mrb[0].mxu0
    %v193 = vadd.f32 %v128, %v192
    %v194 = vpop.f32.mrb[0].mxu0
    %v195 = vpop.f32.mrb[0].mxu0
    %v196 = vpop.f32.mrb[0].mxu0
    %197 = vdwg.mxu0
    %v198 = vmax.f32 %v193, 0.0
    %v199 = vpack.c.bf16 %v198, %v198
    %v200 = vld [vmem:[#allocation6] sm:$0xff]
    %v201 = vld [vmem:[#allocation6 + $0x8] sm:$0xff]
    %v202 = vld [vmem:[#allocation6 + $0x10] sm:$0xff]
    %v203 = vld [vmem:[#allocation6 + $0x18] sm:$0xff]
    %v204 = vld [vmem:[#allocation6 + $0x20] sm:$0xff]
    %v205 = vld [vmem:[#allocation6 + $0x28] sm:$0xff]
    %v206 = vld [vmem:[#allocation6 + $0x30] sm:$0xff]
    %v207 = vld [vmem:[#allocation6 + $0x38] sm:$0xff]
    %v208 = vld [vmem:[%s4] sm:$0x3]
    %v210 = vlaneseq
    %v211 = vshrl.u32 %v210, 7
    %v212 = vsub.s32 0, %v211
    %v213 = vrot.slane %v208, %v212
    %v214 = vlaneseq
    %v215 = vshrl.u32 %v214, 7
    %v216 = vsub.s32 1, %v215
    %v217 = vrot.slane %v208, %v216
    %v228 = vunpack.c.l.b16 %v200
    %v229 = vunpack.c.h.b16 %v200
    %v230 = vunpack.c.l.b16 %v201
    %v231 = vunpack.c.h.b16 %v201
    %v232 = vunpack.c.l.b16 %v202
    %v233 = vunpack.c.h.b16 %v202
    %v234 = vunpack.c.l.b16 %v203
    %v235 = vunpack.c.h.b16 %v203
    %v236 = vunpack.c.l.b16 %v204
    %v237 = vunpack.c.h.b16 %v204
    %v238 = vunpack.c.l.b16 %v205
    %v239 = vunpack.c.h.b16 %v205
    %v240 = vunpack.c.l.b16 %v206
    %v241 = vunpack.c.h.b16 %v206
    %v242 = vunpack.c.l.b16 %v207
    %v243 = vunpack.c.h.b16 %v207
    %v244 = vpack.c.b16 %v230, %v228
    %v245 = vpack.c.b16 %v231, %v229
    %v246 = vpack.c.b16 %v234, %v232
    %v247 = vpack.c.b16 %v235, %v233
    %v248 = vpack.c.b16 %v238, %v236
    %v249 = vpack.c.b16 %v239, %v237
    %v250 = vpack.c.b16 %v242, %v240
    %v251 = vpack.c.b16 %v243, %v241
    %v261 = vsel %vm154, %v199, 0
    %263 = vmatprep.subr.bf16.mxu0 %v245
    %264 = vmatpush1.bf16.msra.mxu0 %v244
    %265 = vmatprep.subr.bf16.mxu0 %v247
    %266 = vmatpush1.bf16.msra.mxu0 %v246
    %267 = vmatprep.subr.bf16.mxu0 %v249
    %268 = vmatpush1.bf16.msra.mxu0 %v248
    %269 = vmatprep.subr.bf16.mxu0 %v251
    %270 = vmatpush1.bf16.msra.mxu0 %v250
    %271 = vmatprep.subr.bf16.mxu0 0
    %272 = vmatpush1.bf16.msra.mxu0 0
    %273 = vmatprep.subr.bf16.mxu0 0
    %274 = vmatpush1.bf16.msra.mxu0 0
    %275 = vmatprep.subr.bf16.mxu0 0
    %276 = vmatpush1.bf16.msra.mxu0 0
    %277 = vmatprep.subr.bf16.mxu0 0
    %278 = vmatpush1.bf16.msra.mxu0 0
    %279 = vmatprep.subr.bf16.mxu0 0
    %280 = vmatpush1.bf16.msra.mxu0 0
    %281 = vmatprep.subr.bf16.mxu0 0
    %282 = vmatpush1.bf16.msra.mxu0 0
    %283 = vmatprep.subr.bf16.mxu0 0
    %284 = vmatpush1.bf16.msra.mxu0 0
    %285 = vmatprep.subr.bf16.mxu0 0
    %286 = vmatpush1.bf16.msra.mxu0 0
    %287 = vmatprep.subr.bf16.mxu0 0
    %288 = vmatpush1.bf16.msra.mxu0 0
    %289 = vmatprep.subr.bf16.mxu0 0
    %290 = vmatpush1.bf16.msra.mxu0 0
    %291 = vmatprep.subr.bf16.mxu0 0
    %292 = vmatpush1.bf16.msra.mxu0 0
    %293 = vmatprep.subr.bf16.mxu0 0
    %294 = vmatpush1.bf16.msra.mxu0 0
    %295 = vmatprep.mubr.bf16.mxu0 0
    %296 = vmatmul.mubr.bf16.gmra.mrb[0].mxu0 %v261
    %v297 = vpop.f32.mrb[0].mxu0
    %v298 = vadd.f32 %v213, %v297
    %v299 = vpop.f32.mrb[0].mxu0
    %v300 = vadd.f32 %v217, %v299
    %v301 = vpop.f32.mrb[0].mxu0
    %v302 = vpop.f32.mrb[0].mxu0
    %303 = vdwg.mxu0
    %v304 = vpack.c.bf16 %v300, %v300
    %v305 = vld [vmem:[#allocation10] sm:$0xf]
    %v306 = vld [vmem:[#allocation10 + $0x4] sm:$0xf]
    %v307 = vld [vmem:[#allocation10 + $0x8] sm:$0xf]
    %v308 = vld [vmem:[#allocation10 + $0xc] sm:$0xf]
    %v309 = vld [vmem:[#allocation10 + $0x10] sm:$0xf]
    %v310 = vld [vmem:[#allocation10 + $0x14] sm:$0xf]
    %v311 = vld [vmem:[#allocation10 + $0x18] sm:$0xf]
    %v312 = vld [vmem:[#allocation10 + $0x1c] sm:$0xf]
    %v313 = vld [vmem:[#allocation10 + $0x20] sm:$0xf]
    %v314 = vld [vmem:[#allocation10 + $0x24] sm:$0xf]
    %v315 = vld [vmem:[#allocation10 + $0x28] sm:$0xf]
    %v316 = vld [vmem:[#allocation10 + $0x2c] sm:$0xf]
    %v317 = vld [vmem:[#allocation10 + $0x30] sm:$0xf]
    %v318 = vld [vmem:[#allocation10 + $0x34] sm:$0xf]
    %v319 = vld [vmem:[#allocation10 + $0x38] sm:$0xf]
    %v320 = vld [vmem:[#allocation10 + $0x3c] sm:$0xf]
    %v337 = vunpack.c.l.b16 %v305
    %v338 = vunpack.c.l.b16 %v306
    %v339 = vunpack.c.l.b16 %v307
    %v340 = vunpack.c.l.b16 %v308
    %v341 = vunpack.c.l.b16 %v309
    %v342 = vunpack.c.l.b16 %v310
    %v343 = vunpack.c.l.b16 %v311
    %v344 = vunpack.c.l.b16 %v312
    %v345 = vunpack.c.l.b16 %v313
    %v346 = vunpack.c.l.b16 %v314
    %v347 = vunpack.c.l.b16 %v315
    %v348 = vunpack.c.l.b16 %v316
    %v349 = vunpack.c.l.b16 %v317
    %v350 = vunpack.c.l.b16 %v318
    %v351 = vunpack.c.l.b16 %v319
    %v352 = vunpack.c.l.b16 %v320
    %v353 = vpack.c.b16 %v338, %v337
    %v354 = vpack.c.b16 %v340, %v339
    %v355 = vpack.c.b16 %v342, %v341
    %v356 = vpack.c.b16 %v344, %v343
    %v357 = vpack.c.b16 %v346, %v345
    %v358 = vpack.c.b16 %v348, %v347
    %v359 = vpack.c.b16 %v350, %v349
    %v360 = vpack.c.b16 %v352, %v351
    %369 = vmatprep.subr.bf16.mxu0 0
    %370 = vmatpush1.bf16.msra.mxu0 %v353
    %371 = vmatprep.subr.bf16.mxu0 0
    %372 = vmatpush1.bf16.msra.mxu0 %v354
    %373 = vmatprep.subr.bf16.mxu0 0
    %374 = vmatpush1.bf16.msra.mxu0 %v355
    %375 = vmatprep.subr.bf16.mxu0 0
    %376 = vmatpush1.bf16.msra.mxu0 %v356
    %377 = vmatprep.subr.bf16.mxu0 0
    %378 = vmatpush1.bf16.msra.mxu0 %v357
    %379 = vmatprep.subr.bf16.mxu0 0
    %380 = vmatpush1.bf16.msra.mxu0 %v358
    %381 = vmatprep.subr.bf16.mxu0 0
    %382 = vmatpush1.bf16.msra.mxu0 %v359
    %383 = vmatprep.subr.bf16.mxu0 0
    %384 = vmatpush1.bf16.msra.mxu0 %v360
    %385 = vmatprep.subr.bf16.mxu0 0
    %386 = vmatpush1.bf16.msra.mxu0 0
    %387 = vmatprep.subr.bf16.mxu0 0
    %388 = vmatpush1.bf16.msra.mxu0 0
    %389 = vmatprep.subr.bf16.mxu0 0
    %390 = vmatpush1.bf16.msra.mxu0 0
    %391 = vmatprep.subr.bf16.mxu0 0
    %392 = vmatpush1.bf16.msra.mxu0 0
    %393 = vmatprep.subr.bf16.mxu0 0
    %394 = vmatpush1.bf16.msra.mxu0 0
    %395 = vmatprep.subr.bf16.mxu0 0
    %396 = vmatpush1.bf16.msra.mxu0 0
    %397 = vmatprep.subr.bf16.mxu0 0
    %398 = vmatpush1.bf16.msra.mxu0 0
    %399 = vmatprep.subr.bf16.mxu0 0
    %400 = vmatpush1.bf16.msra.mxu0 0
    %401 = vmatprep.mubr.bf16.mxu0 0
    %402 = vmatmul.mubr.bf16.gmra.mrb[0].mxu0 %v304
    %v403 = vpop.f32.mrb[0].mxu0
    %v404 = vadd.f32 0.0, %v403
    %v405 = vpop.f32.mrb[0].mxu0
    %v406 = vpop.f32.mrb[0].mxu0
    %v407 = vpop.f32.mrb[0].mxu0
    %408 = vdwg.mxu0
    %v409 = vsub.f32 %v300, %v404
    %v410 = vmul.f32 %v409, 1.442695
    %v411 = vpow.pop %v410
    %v412 = vpack.c.bf16 %v298, %v298
    %v413 = vld [vmem:[#allocation7] sm:$0xf]
    %v414 = vld [vmem:[#allocation7 + $0x4] sm:$0xf]
    %v415 = vld [vmem:[#allocation7 + $0x8] sm:$0xf]
    %v416 = vld [vmem:[#allocation7 + $0xc] sm:$0xf]
    %v417 = vld [vmem:[#allocation7 + $0x10] sm:$0xf]
    %v418 = vld [vmem:[#allocation7 + $0x14] sm:$0xf]
    %v419 = vld [vmem:[#allocation7 + $0x18] sm:$0xf]
    %v420 = vld [vmem:[#allocation7 + $0x1c] sm:$0xf]
    %v421 = vld [vmem:[#allocation7 + $0x20] sm:$0xf]
    %v422 = vld [vmem:[#allocation7 + $0x24] sm:$0xf]
    %v423 = vld [vmem:[#allocation7 + $0x28] sm:$0xf]
    %v424 = vld [vmem:[#allocation7 + $0x2c] sm:$0xf]
    %v425 = vld [vmem:[#allocation7 + $0x30] sm:$0xf]
    %v426 = vld [vmem:[#allocation7 + $0x34] sm:$0xf]
    %v427 = vld [vmem:[#allocation7 + $0x38] sm:$0xf]
    %v428 = vld [vmem:[#allocation7 + $0x3c] sm:$0xf]
    %v445 = vunpack.c.l.b16 %v413
    %v446 = vunpack.c.l.b16 %v414
    %v447 = vunpack.c.l.b16 %v415
    %v448 = vunpack.c.l.b16 %v416
    %v449 = vunpack.c.l.b16 %v417
    %v450 = vunpack.c.l.b16 %v418
    %v451 = vunpack.c.l.b16 %v419
    %v452 = vunpack.c.l.b16 %v420
    %v453 = vunpack.c.l.b16 %v421
    %v454 = vunpack.c.l.b16 %v422
    %v455 = vunpack.c.l.b16 %v423
    %v456 = vunpack.c.l.b16 %v424
    %v457 = vunpack.c.l.b16 %v425
    %v458 = vunpack.c.l.b16 %v426
    %v459 = vunpack.c.l.b16 %v427
    %v460 = vunpack.c.l.b16 %v428
    %v461 = vpack.c.b16 %v446, %v445
    %v462 = vpack.c.b16 %v448, %v447
    %v463 = vpack.c.b16 %v450, %v449
    %v464 = vpack.c.b16 %v452, %v451
    %v465 = vpack.c.b16 %v454, %v453
    %v466 = vpack.c.b16 %v456, %v455
    %v467 = vpack.c.b16 %v458, %v457
    %v468 = vpack.c.b16 %v460, %v459
    %477 = vmatprep.subr.bf16.mxu0 0
    %478 = vmatpush1.bf16.msra.mxu0 %v461
    %479 = vmatprep.subr.bf16.mxu0 0
    %480 = vmatpush1.bf16.msra.mxu0 %v462
    %481 = vmatprep.subr.bf16.mxu0 0
    %482 = vmatpush1.bf16.msra.mxu0 %v463
    %483 = vmatprep.subr.bf16.mxu0 0
    %484 = vmatpush1.bf16.msra.mxu0 %v464
    %485 = vmatprep.subr.bf16.mxu0 0
    %486 = vmatpush1.bf16.msra.mxu0 %v465
    %487 = vmatprep.subr.bf16.mxu0 0
    %488 = vmatpush1.bf16.msra.mxu0 %v466
    %489 = vmatprep.subr.bf16.mxu0 0
    %490 = vmatpush1.bf16.msra.mxu0 %v467
    %491 = vmatprep.subr.bf16.mxu0 0
    %492 = vmatpush1.bf16.msra.mxu0 %v468
    %493 = vmatprep.subr.bf16.mxu0 0
    %494 = vmatpush1.bf16.msra.mxu0 0
    %495 = vmatprep.subr.bf16.mxu0 0
    %496 = vmatpush1.bf16.msra.mxu0 0
    %497 = vmatprep.subr.bf16.mxu0 0
    %498 = vmatpush1.bf16.msra.mxu0 0
    %499 = vmatprep.subr.bf16.mxu0 0
    %500 = vmatpush1.bf16.msra.mxu0 0
    %501 = vmatprep.subr.bf16.mxu0 0
    %502 = vmatpush1.bf16.msra.mxu0 0
    %503 = vmatprep.subr.bf16.mxu0 0
    %504 = vmatpush1.bf16.msra.mxu0 0
    %505 = vmatprep.subr.bf16.mxu0 0
    %506 = vmatpush1.bf16.msra.mxu0 0
    %507 = vmatprep.subr.bf16.mxu0 0
    %508 = vmatpush1.bf16.msra.mxu0 0
    %509 = vmatprep.mubr.bf16.mxu0 0
    %510 = vmatmul.mubr.bf16.gmra.mrb[0].mxu0 %v412
    %v511 = vpop.f32.mrb[0].mxu0
    %v512 = vadd.f32 0.0, %v511
    %v513 = vpop.f32.mrb[0].mxu0
    %v514 = vpop.f32.mrb[0].mxu0
    %v515 = vpop.f32.mrb[0].mxu0
    %516 = vdwg.mxu0
    %v517 = vpack.c.bf16 %v411, %v411
    %v518 = vld [vmem:[#allocation9] sm:$0xf]
    %v519 = vld [vmem:[#allocation9 + $0x4] sm:$0xf]
    %v520 = vld [vmem:[#allocation9 + $0x8] sm:$0xf]
    %v521 = vld [vmem:[#allocation9 + $0xc] sm:$0xf]
    %v522 = vld [vmem:[#allocation9 + $0x10] sm:$0xf]
    %v523 = vld [vmem:[#allocation9 + $0x14] sm:$0xf]
    %v524 = vld [vmem:[#allocation9 + $0x18] sm:$0xf]
    %v525 = vld [vmem:[#allocation9 + $0x1c] sm:$0xf]
    %v526 = vld [vmem:[#allocation9 + $0x20] sm:$0xf]
    %v527 = vld [vmem:[#allocation9 + $0x24] sm:$0xf]
    %v528 = vld [vmem:[#allocation9 + $0x28] sm:$0xf]
    %v529 = vld [vmem:[#allocation9 + $0x2c] sm:$0xf]
    %v530 = vld [vmem:[#allocation9 + $0x30] sm:$0xf]
    %v531 = vld [vmem:[#allocation9 + $0x34] sm:$0xf]
    %v532 = vld [vmem:[#allocation9 + $0x38] sm:$0xf]
    %v533 = vld [vmem:[#allocation9 + $0x3c] sm:$0xf]
    %v534 = vld [vmem:[%s8] sm:$0x1]
    %v536 = vlaneseq
    %v537 = vshrl.u32 %v536, 7
    %v538 = vsub.s32 0, %v537
    %v539 = vrot.slane %v534, %v538
    %v557 = vunpack.c.l.b16 %v518
    %v558 = vunpack.c.l.b16 %v519
    %v559 = vunpack.c.l.b16 %v520
    %v560 = vunpack.c.l.b16 %v521
    %v561 = vunpack.c.l.b16 %v522
    %v562 = vunpack.c.l.b16 %v523
    %v563 = vunpack.c.l.b16 %v524
    %v564 = vunpack.c.l.b16 %v525
    %v565 = vunpack.c.l.b16 %v526
    %v566 = vunpack.c.l.b16 %v527
    %v567 = vunpack.c.l.b16 %v528
    %v568 = vunpack.c.l.b16 %v529
    %v569 = vunpack.c.l.b16 %v530
    %v570 = vunpack.c.l.b16 %v531
    %v571 = vunpack.c.l.b16 %v532
    %v572 = vunpack.c.l.b16 %v533
    %v573 = vpack.c.b16 %v558, %v557
    %v574 = vpack.c.b16 %v560, %v559
    %v575 = vpack.c.b16 %v562, %v561
    %v576 = vpack.c.b16 %v564, %v563
    %v577 = vpack.c.b16 %v566, %v565
    %v578 = vpack.c.b16 %v568, %v567
    %v579 = vpack.c.b16 %v570, %v569
    %v580 = vpack.c.b16 %v572, %v571
    %589 = vmatprep.subr.bf16.mxu0 0
    %590 = vmatpush1.bf16.msra.mxu0 %v573
    %591 = vmatprep.subr.bf16.mxu0 0
    %592 = vmatpush1.bf16.msra.mxu0 %v574
    %593 = vmatprep.subr.bf16.mxu0 0
    %594 = vmatpush1.bf16.msra.mxu0 %v575
    %595 = vmatprep.subr.bf16.mxu0 0
    %596 = vmatpush1.bf16.msra.mxu0 %v576
    %597 = vmatprep.subr.bf16.mxu0 0
    %598 = vmatpush1.bf16.msra.mxu0 %v577
    %599 = vmatprep.subr.bf16.mxu0 0
    %600 = vmatpush1.bf16.msra.mxu0 %v578
    %601 = vmatprep.subr.bf16.mxu0 0
    %602 = vmatpush1.bf16.msra.mxu0 %v579
    %603 = vmatprep.subr.bf16.mxu0 0
    %604 = vmatpush1.bf16.msra.mxu0 %v580
    %605 = vmatprep.subr.bf16.mxu0 0
    %606 = vmatpush1.bf16.msra.mxu0 0
    %607 = vmatprep.subr.bf16.mxu0 0
    %608 = vmatpush1.bf16.msra.mxu0 0
    %609 = vmatprep.subr.bf16.mxu0 0
    %610 = vmatpush1.bf16.msra.mxu0 0
    %611 = vmatprep.subr.bf16.mxu0 0
    %612 = vmatpush1.bf16.msra.mxu0 0
    %613 = vmatprep.subr.bf16.mxu0 0
    %614 = vmatpush1.bf16.msra.mxu0 0
    %615 = vmatprep.subr.bf16.mxu0 0
    %616 = vmatpush1.bf16.msra.mxu0 0
    %617 = vmatprep.subr.bf16.mxu0 0
    %618 = vmatpush1.bf16.msra.mxu0 0
    %619 = vmatprep.subr.bf16.mxu0 0
    %620 = vmatpush1.bf16.msra.mxu0 0
    %621 = vmatprep.mubr.bf16.mxu0 0
    %622 = vmatmul.mubr.bf16.gmra.mrb[0].mxu0 %v517
    %v623 = vpop.f32.mrb[0].mxu0
    %v624 = vadd.f32 %v539, %v623
    %v625 = vpop.f32.mrb[0].mxu0
    %v626 = vpop.f32.mrb[0].mxu0
    %v627 = vpop.f32.mrb[0].mxu0
    %628 = vdwg.mxu0
    %v629 = vmul.f32 %v411, %v512
    %v630 = vpack.c.bf16 %v629, %v629
    %631 = vmatprep.subr.bf16.mxu0 0
    %632 = vmatpush1.bf16.msra.mxu0 %v573
    %633 = vmatprep.subr.bf16.mxu0 0
    %634 = vmatpush1.bf16.msra.mxu0 %v574
    %635 = vmatprep.subr.bf16.mxu0 0
    %636 = vmatpush1.bf16.msra.mxu0 %v575
    %637 = vmatprep.subr.bf16.mxu0 0
    %638 = vmatpush1.bf16.msra.mxu0 %v576
    %639 = vmatprep.subr.bf16.mxu0 0
    %640 = vmatpush1.bf16.msra.mxu0 %v577
    %641 = vmatprep.subr.bf16.mxu0 0
    %642 = vmatpush1.bf16.msra.mxu0 %v578
    %643 = vmatprep.subr.bf16.mxu0 0
    %644 = vmatpush1.bf16.msra.mxu0 %v579
    %645 = vmatprep.subr.bf16.mxu0 0
    %646 = vmatpush1.bf16.msra.mxu0 %v580
    %647 = vmatprep.subr.bf16.mxu0 0
    %648 = vmatpush1.bf16.msra.mxu0 0
    %649 = vmatprep.subr.bf16.mxu0 0
    %650 = vmatpush1.bf16.msra.mxu0 0
    %651 = vmatprep.subr.bf16.mxu0 0
    %652 = vmatpush1.bf16.msra.mxu0 0
    %653 = vmatprep.subr.bf16.mxu0 0
    %654 = vmatpush1.bf16.msra.mxu0 0
    %655 = vmatprep.subr.bf16.mxu0 0
    %656 = vmatpush1.bf16.msra.mxu0 0
    %657 = vmatprep.subr.bf16.mxu0 0
    %658 = vmatpush1.bf16.msra.mxu0 0
    %659 = vmatprep.subr.bf16.mxu0 0
    %660 = vmatpush1.bf16.msra.mxu0 0
    %661 = vmatprep.subr.bf16.mxu0 0
    %662 = vmatpush1.bf16.msra.mxu0 0
    %663 = vmatprep.mubr.bf16.mxu0 0
    %664 = vmatmul.mubr.bf16.gmra.mrb[0].mxu0 %v630
    %v665 = vpop.f32.mrb[0].mxu0
    %v666 = vadd.f32 0.0, %v665
    %v667 = vpop.f32.mrb[0].mxu0
    %v668 = vpop.f32.mrb[0].mxu0
    %v669 = vpop.f32.mrb[0].mxu0
    %670 = vdwg.mxu0
    %v671 = vrcp.pop %v624
    %v672 = vmul.f32 %v624, %v671
    %v673 = vsub.f32 2.0, %v672
    %v674 = vmul.f32 %v671, %v673
    %v675 = vmul.f32 %v666, %v674
    %v676 = vadd.f32 %v675, %v298
    %v677 = vpack.c.bf16 %v676, %v676
    %678 = vst [vmem:[%s9] sm:$0x1] %v677
    // Predicated region
    $region62: #{radar_classifier_forward.1} parent=1 // pred_check
      _
    $region63: #{radar_classifier_forward.1} parent=1 // pred_check_branch
      %680 = sbr.rel (0) target = $region65
    $region64: #{radar_classifier_forward.1} parent=1 // pred_region
      _
    $region65: #{radar_classifier_forward.1} parent=1 // pred_fallthru
      _
    // Predicated region
    $region66: #{radar_classifier_forward.1} parent=1 // pred_check
      _
    $region67: #{radar_classifier_forward.1} parent=1 // pred_check_branch
      %682 = sbr.rel (0) target = $region69
    $region68: #{radar_classifier_forward.1} parent=1 // pred_region
      _
    $region69: #{radar_classifier_forward.1} parent=1 // pred_fallthru
      _
    %683 = vsyncpa [#allocation3], 1
    %684 = vsyncpa [#allocation5], 1
    %685 = vsyncpa [#allocation8], 1
    %686 = vsyncpa [#allocation11], 1

</llo_original>
